<compile_context>
chip_gen: v7x
topology: tpu7x:2x2x1
jax: 0.10.0
libtpu: 0.0.40
codegen_flags: <defaults>
</compile_context>

<pallas_src>
import functools

import jax
import jax.numpy as jnp
from jax import lax
from jax.experimental import pallas as pl
from jax.experimental.pallas import tpu as pltpu

LANES = 128
CHUNK_ROWS = 512                # inner streaming chunk: 512x128 f32 = 256 KiB
VMEM_LIMIT_BYTES = 32 << 20     # covers 2 inputs x 2 buffers x 2 MiB + temps


def _chip_config():
    """Returns (max_row_tile, num_core_splits) for the local TPU generation."""
    try:
        kind = jax.devices()[0].device_kind.lower()
    except Exception:
        kind = ""
    if "v5 lite" in kind or "v5e" in kind or "v5litepod" in kind:
        # Lowest HBM BW; 2048-row tiles amortize per-step overhead while
        # staying comfortably inside the 16 MiB scoped-VMEM default.
        return 2048, 1
    if "7x" in kind or "v7" in kind:
        # Two TensorCores per chip: keep the 2-way "parallel" core split.
        return 4096, 2
    # v6e / other single-TensorCore chips: large tiles, no core split.
    return 4096, 1


def _kl_kernel(mu_ref, lv_ref, out_ref, *, rows, row_tile, chunk,
               tiles_per_core, any_masking):
    """Per-core partial of sum(logvar - mu^2 - exp(logvar)) over valid rows.

    out_ref is a vreg-shaped (8, 128) f32 block resident across the reduction
    axis and used directly as the accumulator.  The "+1" term and the
    -0.5/numel scale are folded in analytically by the wrapper.
    """
    c = pl.program_id(0)   # core-split axis ("parallel")
    i = pl.program_id(1)   # row-tile axis  ("arbitrary", reduction)

    @pl.when(i == 0)
    def _():
        out_ref[...] = jnp.zeros_like(out_ref)

    # Unclamped start row of this tile (the index_map clamps out-of-range
    # duplicate tiles; the masked branch below neutralizes them).
    tile_row0 = (c * tiles_per_core + i) * row_tile

    def accumulate(masked):
        n_chunks = row_tile // chunk

        def body(j, acc):
            r0 = pl.multiple_of(j * chunk, chunk)
            mu = mu_ref[pl.ds(r0, chunk), :].astype(jnp.float32)
            lv = lv_ref[pl.ds(r0, chunk), :].astype(jnp.float32)
            term = lv - mu * mu - jnp.exp(lv)
            if masked:
                # Select (NOT multiply): rows past `rows` hold unspecified
                # data from the partial edge DMA and must be discarded.
                row = (tile_row0 + r0
                       + lax.broadcasted_iota(jnp.int32, (chunk, LANES), 0))
                term = jnp.where(row < rows, term, 0.0)
            # vreg-shaped accumulation: group rows into (8, 128) vregs and
            # add them -- pure VALU work, no cross-lane reduce per step.
            return acc + term.reshape(chunk // 8, 8, LANES).sum(axis=0)

        acc0 = jnp.zeros((8, LANES), jnp.float32)
        out_ref[...] += lax.fori_loop(0, n_chunks, body, acc0, unroll=True)

    if any_masking:
        # Only the tile that can straddle `rows` (plus clamped duplicate
        # tiles on the split core) pays for the iota/compare/select.
        needs_mask = tile_row0 + row_tile > rows

        @pl.when(needs_mask)
        def _():
            accumulate(masked=True)

        @pl.when(jnp.logical_not(needs_mask))
        def _():
            accumulate(masked=False)
    else:
        accumulate(masked=False)


@jax.jit
def kl_loss(mu, logvar):
    """Pallas equivalent of KLLoss.forward(mu, logvar)."""
    assert mu.shape == logvar.shape
    numel = mu.size
    assert numel > 0

    in_dtype = jnp.dtype(mu.dtype)
    # Min sublane multiple: 8 rows for 4-byte, 16 for 2-byte, 32 for 1-byte.
    sub = 8 * max(1, 4 // in_dtype.itemsize)

    mu_f = mu.reshape(-1)
    lv_f = logvar.reshape(-1)

    # Lane-pad so the flat array views as a (rows, 128) slab.  Each zero-pad
    # element contributes exactly -1 to sum(lv - mu^2 - exp(lv)); the wrapper
    # adds the statically known correction back.  The common large,
    # 128-aligned case is copy-free.
    min_len = sub * LANES
    padded = max(min_len, ((numel + LANES - 1) // LANES) * LANES)
    if padded != numel:
        mu_f = jnp.pad(mu_f, (0, padded - numel))
        lv_f = jnp.pad(lv_f, (0, padded - numel))
    rows = padded // LANES
    mu2d = mu_f.reshape(rows, LANES)
    lv2d = lv_f.reshape(rows, LANES)

    max_row_tile, num_core_splits = _chip_config()

    # Row tile: chunk-aligned and as large as the per-chip budget allows.
    if rows >= CHUNK_ROWS:
        chunk = CHUNK_ROWS
        row_tile = min(max_row_tile, (rows // chunk) * chunk)
    else:
        row_tile = (rows // sub) * sub
        chunk = row_tile

    total_tiles = pl.cdiv(rows, row_tile)
    num_splits = num_core_splits if total_tiles >= num_core_splits else 1
    tiles_per_core = pl.cdiv(total_tiles, num_splits)
    # Does the grid cover rows beyond the slab (ragged edge tile and/or
    # clamped duplicates)?  If not, the mask code is never even compiled.
    any_masking = num_splits * tiles_per_core * row_tile > rows

    def in_map(c, i):
        # Clamp so duplicated edge tiles stay in bounds; the kernel masks
        # them out via the unclamped index, so they contribute zero.
        return (jnp.minimum(c * tiles_per_core + i, total_tiles - 1), 0)

    kernel = functools.partial(
        _kl_kernel,
        rows=rows,
        row_tile=row_tile,
        chunk=chunk,
        tiles_per_core=tiles_per_core,
        any_masking=any_masking,
    )

    partials = pl.pallas_call(
        kernel,
        out_shape=jax.ShapeDtypeStruct((num_splits, 8, LANES), jnp.float32),
        grid_spec=pltpu.PrefetchScalarGridSpec(
            num_scalar_prefetch=0,
            grid=(num_splits, tiles_per_core),
            in_specs=[
                # NOTE: pipeline_mode=pl.Buffered(3) is a candidate knob; kept
                # at default double-buffering absent evidence of exposed DMA.
                pl.BlockSpec((row_tile, LANES), in_map),
                pl.BlockSpec((row_tile, LANES), in_map),
            ],
            out_specs=pl.BlockSpec((None, 8, LANES), lambda c, i: (c, 0, 0)),
        ),
        compiler_params=pltpu.CompilerParams(
            dimension_semantics=("parallel", "arbitrary"),
            vmem_limit_bytes=VMEM_LIMIT_BYTES,
        ),
    )(mu2d, lv2d)

    # sum_real(1 + lv - mu^2 - exp(lv)) = numel + S_kernel + (padded - numel)
    #                                   = S_kernel + padded
    # since each zero-pad element contributed exactly -1 to S_kernel.
    scale = -0.5 / numel
    return scale * (jnp.sum(partials) + float(padded))


def kl_loss_ref(mu, logvar):
    kld = -0.5 * jnp.sum(1.0 + logvar - mu**2 - jnp.exp(logvar))
    return kld / mu.size


if __name__ == "__main__":
    key = jax.random.PRNGKey(0)
    k1, k2 = jax.random.split(key)

    # Shapes consistent with a VAE latent: (batch=2, channels=4, 16, 16).
    mu = jax.random.normal(k1, (2, 4, 16, 16), dtype=jnp.float32)
    logvar = jax.random.normal(k2, (2, 4, 16, 16), dtype=jnp.float32) * 0.5

    out = jax.block_until_ready(kl_loss(mu, logvar))
    ref = kl_loss_ref(mu, logvar)
    assert jnp.allclose(out, ref, rtol=1e-5, atol=1e-6), (out, ref)

    # Ragged (non-lane-aligned) case: exercises the zero-pad correction.
    k3, k4 = jax.random.split(k1)
    mu_r = jax.random.normal(k3, (5, 7, 13), dtype=jnp.float32)
    lv_r = jax.random.normal(k4, (5, 7, 13), dtype=jnp.float32) * 0.5
    out_r = jax.block_until_ready(kl_loss(mu_r, lv_r))
    ref_r = kl_loss_ref(mu_r, lv_r)
    assert jnp.allclose(out_r, ref_r, rtol=1e-5, atol=1e-6), (out_r, ref_r)

    # Larger case: multi-tile reduction, partial edge tile (masked branch),
    # and the 2-way core split on v7x.
    k5, k6 = jax.random.split(k2)
    mu_l = jax.random.normal(k5, (4, 8, 512, 130), dtype=jnp.float32)
    lv_l = jax.random.normal(k6, (4, 8, 512, 130), dtype=jnp.float32) * 0.5
    out_l = jax.block_until_ready(kl_loss(mu_l, lv_l))
    ref_l = kl_loss_ref(mu_l, lv_l)
    assert jnp.allclose(out_l, ref_l, rtol=1e-4, atol=1e-5), (out_l, ref_l)

    print("KERNEL_OK")
</pallas_src>

<mosaic_0001>
module attributes {stable_mosaic.version = 11 : i64} {
  func.func @_kl_kernel(%arg0: i32, %arg1: i32, %arg2: memref<16x128xf32, #tpu.memory_space<vmem>>, %arg3: memref<16x128xf32, #tpu.memory_space<vmem>>, %arg4: memref<1x8x128xf32, #tpu.memory_space<vmem>>) attributes {dimension_semantics = [#tpu.dimension_semantics<parallel>, #tpu.dimension_semantics<arbitrary>], iteration_bounds = array<i64: 1, 1>, scalar_prefetch = 0 : i64, scratch_operands = 0 : i64, tpu.core_type = #tpu.core_type<tc>, window_params = [{transform_indices = @transform_0, window_bounds = array<i64: 16, 128>}, {transform_indices = @transform_1, window_bounds = array<i64: 16, 128>}, {transform_indices = @transform_2, window_bounds = array<i64: 1, 8, 128>}]} {
    %c0_i32 = arith.constant 0 : i32
    %0 = arith.cmpi eq, %arg1, %c0_i32 : i32
    %1 = arith.extui %0 : i1 to i32
    %c0_i32_0 = arith.constant 0 : i32
    %2 = arith.cmpi ne, %1, %c0_i32_0 : i32
    scf.if %2 {
      %cst_10 = arith.constant 0.000000e+00 : f32
      %23 = vector.broadcast %cst_10 : f32 to vector<8x128xf32>
      %c0_11 = arith.constant 0 : index
      %c0_12 = arith.constant 0 : index
      %c0_13 = arith.constant 0 : index
      %24 = vector.load %arg4[%c0_11, %c0_12, %c0_13] : memref<1x8x128xf32, #tpu.memory_space<vmem>>, vector<1x8x128xf32>
      %25 = vector.shape_cast %24 : vector<1x8x128xf32> to vector<8x128xf32>
      %26 = vector.shape_cast %23 : vector<8x128xf32> to vector<1x8x128xf32>
      tpu.vector_store %arg4[%c0_11, %c0_12, %c0_13], %26 {strides = array<i32>} : memref<1x8x128xf32, #tpu.memory_space<vmem>>, vector<1x8x128xf32>,
    } else {
    }
    %cst = arith.constant 0.000000e+00 : f32
    %3 = vector.broadcast %cst : f32 to vector<8x128xf32>
    %c0 = arith.constant 0 : index
    %c0_1 = arith.constant 0 : index
    %c0_2 = arith.constant 0 : index
    %4 = vector.load %arg4[%c0, %c0_1, %c0_2] : memref<1x8x128xf32, #tpu.memory_space<vmem>>, vector<1x8x128xf32>
    %5 = vector.shape_cast %4 : vector<1x8x128xf32> to vector<8x128xf32>
    %c0_i32_3 = arith.constant 0 : i32
    %c16_i32 = arith.constant 16 : i32
    %6 = arith.muli %c0_i32_3, %c16_i32 : i32
    %7 = tpu.assume_multiple %6, 16 : i32
    %8 = arith.index_cast %7 : i32 to index
    %c0_4 = arith.constant 0 : index
    %9 = vector.load %arg2[%8, %c0_4] : memref<16x128xf32, #tpu.memory_space<vmem>>, vector<16x128xf32>
    %10 = arith.index_cast %7 : i32 to index
    %c0_5 = arith.constant 0 : index
    %11 = vector.load %arg3[%10, %c0_5] : memref<16x128xf32, #tpu.memory_space<vmem>>, vector<16x128xf32>
    %12 = arith.mulf %9, %9 : vector<16x128xf32>
    %13 = arith.subf %11, %12 : vector<16x128xf32>
    %14 = math.exp %11 : vector<16x128xf32>
    %15 = arith.subf %13, %14 : vector<16x128xf32>
    %16 = vector.shape_cast %15 : vector<16x128xf32> to vector<2x8x128xf32>
    %cst_6 = arith.constant dense<0.000000e+00> : vector<8x128xf32>
    %17 = vector.multi_reduction <add>, %16, %cst_6 [0] : vector<2x8x128xf32> to vector<8x128xf32>
    %18 = arith.addf %3, %17 : vector<8x128xf32>
    %c1_i32 = arith.constant 1 : i32
    %19 = arith.addf %5, %18 : vector<8x128xf32>
    %c0_7 = arith.constant 0 : index
    %c0_8 = arith.constant 0 : index
    %c0_9 = arith.constant 0 : index
    %20 = vector.load %arg4[%c0_7, %c0_8, %c0_9] : memref<1x8x128xf32, #tpu.memory_space<vmem>>, vector<1x8x128xf32>
    %21 = vector.shape_cast %20 : vector<1x8x128xf32> to vector<8x128xf32>
    %22 = vector.shape_cast %19 : vector<8x128xf32> to vector<1x8x128xf32>
    tpu.vector_store %arg4[%c0_7, %c0_8, %c0_9], %22 {strides = array<i32>} : memref<1x8x128xf32, #tpu.memory_space<vmem>>, vector<1x8x128xf32>,
    return
  }
  func.func @transform_0(%arg0: i32, %arg1: i32) -> (i32, i32) {
    %c1_i32 = arith.constant 1 : i32
    %0 = arith.muli %arg0, %c1_i32 : i32
    %1 = arith.addi %0, %arg1 : i32
    %c0_i32 = arith.constant 0 : i32
    %2 = arith.minsi %1, %c0_i32 : i32
    %c0_i32_0 = arith.constant 0 : i32
    %c0_i32_1 = arith.constant 0 : i32
    return %2, %c0_i32_0 : i32, i32
  }
  func.func @transform_1(%arg0: i32, %arg1: i32) -> (i32, i32) {
    %c1_i32 = arith.constant 1 : i32
    %0 = arith.muli %arg0, %c1_i32 : i32
    %1 = arith.addi %0, %arg1 : i32
    %c0_i32 = arith.constant 0 : i32
    %2 = arith.minsi %1, %c0_i32 : i32
    %c0_i32_0 = arith.constant 0 : i32
    %c0_i32_1 = arith.constant 0 : i32
    return %2, %c0_i32_0 : i32, i32
  }
  func.func @transform_2(%arg0: i32, %arg1: i32) -> (i32, i32, i32) {
    %c0_i32 = arith.constant 0 : i32
    %c0_i32_0 = arith.constant 0 : i32
    %c0_i32_1 = arith.constant 0 : i32
    return %arg0, %c0_i32, %c0_i32_0 : i32, i32, i32
  }
}

</mosaic_0001>

<llo_original>
// kernel: kl_loss.1
$region0: #{kl_loss.1}
  #allocation0 [shape = 'u32[]', space=smem, size = 0x4, offset = 0x4, fixed_abs, tag = 'smem constant byte address 0x4 - core index']
  #allocation1 [shape = 'u32[144,128]{1,0:T(1,128)}', space=vmem, size = 0x12000, scoped, tag = 'internal scratch']
  %s0 = inlined_call_operand.vmem [shape: f32[16,128], index: 0, kind: input, shape index: {}]
  %s1 = inlined_call_operand.vmem [shape: f32[16,128], index: 1, kind: input, shape index: {}]
  %s2 = inlined_call_operand.vmem [shape: f32[1,8,128], index: 2, kind: output, shape index: {}]
  %s3 = sld [smem:[#allocation0]]
  $region22: #{kl_loss.1} parent=0
    _
  %s5 = ssub.s32 1, %s3
  %s6 = scalar_select 0, %s5, %s3
  // Predicated region
  $region2: #{kl_loss.1} parent=0 // pred_check
    _
  $region3: #{kl_loss.1} parent=0 // pred_check_branch
    %8 = sbr.rel (0) target = $region5
  $region4: #{kl_loss.1} parent=0 // pred_region
    %s9 = sadd.s32 0, 0
    %p10 = scmp.lt.s32.totalorder %s9, 0
    %s11 = scalar_select %p10, %s9, 0
    %s12 = smul.u32 2, %s11
    %p13 = scmp.lt.s32.totalorder %s12, 1
    %s14 = scalar_select %p13, %s12, 1
    %s15 = smul.addr %s14, 8
    %s16 = scalar_lea.vmem %s0, %s15
    %s17 = sadd.s32 0, 0
    %p18 = scmp.lt.s32.totalorder %s17, 0
    %s19 = scalar_select %p18, %s17, 0
    %s20 = smul.u32 2, %s19
  $region5: #{kl_loss.1} parent=0 // pred_fallthru
    _
  // Predicated region
  $region6: #{kl_loss.1} parent=0 // pred_check
    _
  $region7: #{kl_loss.1} parent=0 // pred_check_branch
    %22 = sbr.rel (0) target = $region9
  $region8: #{kl_loss.1} parent=0 // pred_region
    %s23 = sadd.s32 0, 0
    %p24 = scmp.lt.s32.totalorder %s23, 0
    %s25 = scalar_select %p24, %s23, 0
    %s26 = smul.u32 2, %s25
    %p27 = scmp.lt.s32.totalorder %s26, 1
    %s28 = scalar_select %p27, %s26, 1
    %s29 = smul.addr %s28, 8
    %s30 = scalar_lea.vmem %s1, %s29
    %s31 = sadd.s32 0, 0
    %p32 = scmp.lt.s32.totalorder %s31, 0
    %s33 = scalar_select %p32, %s31, 0
    %s34 = smul.u32 2, %s33
  $region9: #{kl_loss.1} parent=0 // pred_fallthru
    _
  %s35 = sadd.s32 0, 0
  %p36 = scmp.lt.s32.totalorder %s35, 0
  %s37 = scalar_select %p36, %s35, 0
  %s38 = smul.u32 2, %s37
  %p39 = scmp.lt.s32.totalorder %s38, 1
  %s40 = scalar_select %p39, %s38, 1
  %s41 = smul.addr %s40, 8
  %s42 = scalar_lea.vmem %s0, %s41
  %s43 = sadd.s32 0, 0
  %p44 = scmp.lt.s32.totalorder %s43, 0
  %s45 = scalar_select %p44, %s43, 0
  %s46 = smul.u32 2, %s45
  %p47 = scmp.lt.s32.totalorder %s46, 1
  %s48 = scalar_select %p47, %s46, 1
  %s49 = smul.addr %s48, 8
  %s50 = scalar_lea.vmem %s1, %s49
  %s51 = sadd.s32 0, 0
  %p52 = scmp.lt.s32.totalorder %s51, 0
  %s53 = scalar_select %p52, %s51, 0
  %s54 = smul.u32 2, %s53
  %p55 = scmp.lt.s32.totalorder %s54, 1
  %s56 = scalar_select %p55, %s54, 1
  %s57 = smul.addr %s56, 8
  %s58 = scalar_lea.vmem %s0, %s57
  %s59 = sadd.s32 0, 0
  %p60 = scmp.lt.s32.totalorder %s59, 0
  %s61 = scalar_select %p60, %s59, 0
  %s62 = smul.u32 2, %s61
  %s63 = sadd.s32 0, 0
  %p64 = scmp.lt.s32.totalorder %s63, 0
  %s65 = scalar_select %p64, %s63, 0
  %s66 = smul.u32 2, %s65
  %p67 = scmp.lt.s32.totalorder %s66, 1
  %s68 = scalar_select %p67, %s66, 1
  %s69 = smul.addr %s68, 8
  %s70 = scalar_lea.vmem %s1, %s69
  %s71 = sadd.s32 0, 0
  %p72 = scmp.lt.s32.totalorder %s71, 0
  %s73 = scalar_select %p72, %s71, 0
  %s74 = smul.u32 2, %s73
  %p75 = scmp.eq.s32.totalorder 0, 0
  // Predicated region
  $region10: #{kl_loss.1} parent=0 // pred_check
    %p76 = pneg %p75
  $region11: #{kl_loss.1} parent=0 // pred_check_branch
    %78 = sbr.rel (%p76) target = $region13
  $region12: #{kl_loss.1} parent=0 // pred_region
    %79 = vst [vmem:[%s2] sm:$0xff] 0.0
  $region13: #{kl_loss.1} parent=0 // pred_fallthru
    _
  %v80 = vld [vmem:[%s2] sm:$0xff]
  %v81 = vld [vmem:[%s58] sm:$0xff]
  %v82 = vld [vmem:[%s58 + $0x8] sm:$0xff]
  %v83 = vld [vmem:[%s70] sm:$0xff]
  %v84 = vld [vmem:[%s70 + $0x8] sm:$0xff]
  %v85 = vmul.f32 %v81, %v81
  %v86 = vmul.f32 %v82, %v82
  %v87 = vsub.f32 %v83, %v85
  %v88 = vsub.f32 %v84, %v86
  %v89 = vmul.f32 %v83, 1.442695
  %v90 = vpow.pop %v89
  %v91 = vmul.f32 %v84, 1.442695
  %v92 = vpow.pop %v91
  %v93 = vsub.f32 %v87, %v90
  %v94 = vsub.f32 %v88, %v92
  %v95 = vadd.f32 %v93, %v94
  %v96 = vadd.f32 %v95, 0.0
  %v97 = vadd.f32 %v80, %v96
  %98 = vst [vmem:[%s2] sm:$0xff] %v97
  // Predicated region
  $region14: #{kl_loss.1} parent=0 // pred_check
    _
  $region15: #{kl_loss.1} parent=0 // pred_check_branch
    %100 = sbr.rel (0) target = $region17
  $region16: #{kl_loss.1} parent=0 // pred_region
    _
  $region17: #{kl_loss.1} parent=0 // pred_fallthru
    _
  // Predicated region
  $region18: #{kl_loss.1} parent=0 // pred_check
    _
  $region19: #{kl_loss.1} parent=0 // pred_check_branch
    %102 = sbr.rel (0) target = $region21
  $region20: #{kl_loss.1} parent=0 // pred_region
    _
  $region21: #{kl_loss.1} parent=0 // pred_fallthru
    _

</llo_original>
